<compile_context>
chip_gen: v6e
topology: v6e:2x2x1
jax: 0.10.0
libtpu: 0.0.40
codegen_flags: <defaults>
</compile_context>

<pallas_src>
import jax
import jax.numpy as jnp
from jax.experimental import pallas as pl
from jax.experimental.pallas import tpu as pltpu


def _affine_kernel(x_ref, o_ref):
    # ((x + 2) * 3) - 1, original op order (weak-typed constants preserve the
    # input dtype).  3 VPU ops, fully hidden under the HBM-bound DMA stream.
    o_ref[...] = (x_ref[...] + 2) * 3 - 1


_LANE_CANDIDATES = (4096, 2048, 1024, 512, 256, 128)
_MAX_TILE_BYTES = 4 * 1024 * 1024    # ~4 MiB/block -> <=16 MiB double-buffered in+out
_MIN_SPLIT_BYTES = 2 * 1024 * 1024   # force >=2 grid steps above this (v7x megacore)
_ROW_ALIGN = {1: 32, 2: 16, 4: 8, 8: 8}  # rows per packed sublane group by itemsize


def pt_module_forward(x, *, donate=False):
    """Applies ((x + 2) * 3) - 1 elementwise via a Pallas TPU kernel."""
    orig_shape = x.shape
    total = int(x.size)
    if total == 0:
        return x

    # Widest lane width that divides the element count exactly.
    C = next((c for c in _LANE_CANDIDATES if total % c == 0), None)
    if C is None:
        # Ragged element count: the fused XLA elementwise op is already at the
        # HBM roofline; a pad + slice path would roughly triple HBM traffic.
        return (x + 2) * 3 - 1

    itemsize = jnp.dtype(x.dtype).itemsize
    align = _ROW_ALIGN.get(itemsize, 8)
    total_bytes = total * itemsize

    R = total // C
    x2d = x.reshape(R, C)  # contiguous reshape: free in XLA

    # Row-tile selection.
    tr_cap = max(align, (_MAX_TILE_BYTES // (C * itemsize)) // align * align)
    if R <= align or total_bytes <= _MIN_SPLIT_BYTES:
        # Small input: one whole-array block (block == full dims is legal).
        TR = R
    else:
        upper = min(tr_cap, R)
        if R <= tr_cap:
            # Medium input that fits a single tile: split anyway so both v7x
            # TensorCores stream and writeback(i) overlaps prefetch(i+1).
            upper = max(align, (R // 2) // align * align)
        # Prefer a TR that divides R -> every block store unmasked/lane-dense.
        TR = next((c for c in range(upper, align - 1, -align) if R % c == 0), upper)
    grid_r = pl.cdiv(R, TR)

    out2d = pl.pallas_call(
        _affine_kernel,
        out_shape=jax.ShapeDtypeStruct((R, C), x2d.dtype),
        grid_spec=pltpu.PrefetchScalarGridSpec(
            num_scalar_prefetch=0,
            grid=(grid_r,),
            in_specs=[pl.BlockSpec((TR, C), lambda i: (i, 0))],
            out_specs=pl.BlockSpec((TR, C), lambda i: (i, 0)),
        ),
        compiler_params=pltpu.CompilerParams(
            dimension_semantics=("parallel",),
            vmem_limit_bytes=32 << 20,  # headroom over v5e's 16 MiB scoped default
        ),
        cost_estimate=pl.CostEstimate(
            flops=3 * total,
            bytes_accessed=2 * total_bytes,
            transcendentals=0,
        ),
        input_output_aliases=({0: 0} if donate else {}),
    )(x2d)

    return out2d.reshape(orig_shape)


if __name__ == "__main__":
    key = jax.random.PRNGKey(0)
    x = jax.random.normal(key, (2, 4, 16, 16), dtype=jnp.float32)

    out = jax.block_until_ready(pt_module_forward(x))

    # Reference check against plain JAX semantics of the PyTorch module.
    ref = (x + 2.0) * 3.0 - 1.0
    assert out.shape == x.shape
    assert out.dtype == x.dtype
    assert jnp.allclose(out, ref, atol=1e-6, rtol=1e-6)

    # Also exercise the ragged-total fallback path (105 elements).
    x2 = jax.random.normal(jax.random.PRNGKey(1), (3, 5, 7), dtype=jnp.float32)
    out2 = jax.block_until_ready(pt_module_forward(x2))
    assert jnp.allclose(out2, (x2 + 2.0) * 3.0 - 1.0, atol=1e-6, rtol=1e-6)

    print("KERNEL_OK")
</pallas_src>

<mosaic_0001>
module attributes {stable_mosaic.version = 11 : i64} {
  func.func @_affine_kernel(%arg0: i32, %arg1: memref<1x2048xf32, #tpu.memory_space<vmem>>, %arg2: memref<1x2048xf32, #tpu.memory_space<vmem>>) attributes {dimension_semantics = [#tpu.dimension_semantics<parallel>], iteration_bounds = array<i64: 1>, scalar_prefetch = 0 : i64, scratch_operands = 0 : i64, tpu.core_type = #tpu.core_type<tc>, window_params = [{transform_indices = @transform_0, window_bounds = array<i64: 1, 2048>}, {transform_indices = @transform_1, window_bounds = array<i64: 1, 2048>}]} {
    %c0 = arith.constant 0 : index
    %c0_0 = arith.constant 0 : index
    %0 = vector.load %arg1[%c0, %c0_0] : memref<1x2048xf32, #tpu.memory_space<vmem>>, vector<1x2048xf32>
    %cst = arith.constant 2.000000e+00 : f32
    %1 = vector.broadcast %cst : f32 to vector<1x2048xf32>
    %2 = arith.addf %0, %1 : vector<1x2048xf32>
    %cst_1 = arith.constant 3.000000e+00 : f32
    %3 = vector.broadcast %cst_1 : f32 to vector<1x2048xf32>
    %4 = arith.mulf %2, %3 : vector<1x2048xf32>
    %cst_2 = arith.constant 1.000000e+00 : f32
    %5 = vector.broadcast %cst_2 : f32 to vector<1x2048xf32>
    %6 = arith.subf %4, %5 : vector<1x2048xf32>
    %c0_3 = arith.constant 0 : index
    %c0_4 = arith.constant 0 : index
    %7 = vector.load %arg2[%c0_3, %c0_4] : memref<1x2048xf32, #tpu.memory_space<vmem>>, vector<1x2048xf32>
    tpu.vector_store %arg2[%c0_3, %c0_4], %6 {strides = array<i32>} : memref<1x2048xf32, #tpu.memory_space<vmem>>, vector<1x2048xf32>,
    return
  }
  func.func @transform_0(%arg0: i32) -> (i32, i32) {
    %c0_i32 = arith.constant 0 : i32
    %c0_i32_0 = arith.constant 0 : i32
    return %arg0, %c0_i32 : i32, i32
  }
  func.func @transform_1(%arg0: i32) -> (i32, i32) {
    %c0_i32 = arith.constant 0 : i32
    %c0_i32_0 = arith.constant 0 : i32
    return %arg0, %c0_i32 : i32, i32
  }
}

</mosaic_0001>

<llo_original>
// kernel: tpu_custom_call.1
$region0: #{tpu_custom_call.1}
  #allocation0 [shape = 'u32[]', space=smem, size = 0x4, offset = 0x4, fixed_abs, tag = 'smem constant byte address 0x4 - core index']
  #allocation1 [shape = 'u32[144,128]{1,0:T(1,128)}', space=vmem, size = 0x12000, scoped, tag = 'internal scratch']
  %s0 = inlined_call_operand.hbm [shape: f32[1,2048], index: 0, kind: input, shape index: {}]
  %s1 = inlined_call_operand.hbm [shape: f32[1,2048], index: 1, kind: output, shape index: {}]
  %s2 = sld [smem:[#allocation0]]
  $region18: #{tpu_custom_call.1} parent=0
    _
  %s4 = ssub.s32 1, %s2
  %s5 = scalar_select 0, %s4, %s2
  $region1: #{tpu_custom_call.1} parent=0
    #allocation2 [shape = 'u8[8192]{0}', space=vmem, size = 0x2000, scoped, tag = 'input window, operand 0, single buffered']
    #allocation3 [shape = 's32[1]{0}', space=sflag, size = 0x4, scoped, tag = 'scoped memory for tpu_custom_call.1']
    #allocation4 [shape = 's32[1]{0}', space=sflag, size = 0x4, scoped, tag = 'scoped memory for tpu_custom_call.1']
    #allocation5 [shape = 'u8[8192]{0}', space=vmem, size = 0x2000, scoped, tag = 'output window, operand 0, single buffered']
    %6 = vsyncpa [#allocation3], 0
    %7 = vsyncpa [#allocation4], 0
    // Predicated region
    $region2: #{tpu_custom_call.1} parent=1 // pred_check
      _
    $region3: #{tpu_custom_call.1} parent=1 // pred_check_branch
      %9 = sbr.rel (0) target = $region5
    $region4: #{tpu_custom_call.1} parent=1 // pred_region
      %s11 = ssub.s32 256, 256
      %12 = vsyncadd [#allocation3], %s11
      %s14 = sshll.u32 [#allocation2], 4
      %s15 = int_to_ptr.vmem [resolvable:$true] %s14
      %17 = dma.hbm_to_vmem [thread:$0]  %s0, 256, %s15, [#allocation3]
    $region5: #{tpu_custom_call.1} parent=1 // pred_fallthru
      _
    // Predicated region
    $region6: #{tpu_custom_call.1} parent=1 // pred_check
      _
    $region7: #{tpu_custom_call.1} parent=1 // pred_check_branch
      %19 = sbr.rel (0) target = $region9
    $region8: #{tpu_custom_call.1} parent=1 // pred_region
      %20 = dma.done [#allocation3], 256
    $region9: #{tpu_custom_call.1} parent=1 // pred_fallthru
      _
    %v21 = vld [vmem:[#allocation2] sm:$0xff]
    %v22 = vld [vmem:[#allocation2 + $0x8] sm:$0xff]
    %v23 = vadd.f32 %v21, 2.0
    %v24 = vadd.f32 %v22, 2.0
    %v25 = vmul.f32 %v23, 3.0
    %v26 = vmul.f32 %v24, 3.0
    %v27 = vsub.f32 %v25, 1.0
    %v28 = vsub.f32 %v26, 1.0
    %29 = vst [vmem:[#allocation5] sm:$0xff] %v27
    %30 = vst [vmem:[#allocation5 + $0x8] sm:$0xff] %v28
    // Predicated region
    $region10: #{tpu_custom_call.1} parent=1 // pred_check
      _
    $region11: #{tpu_custom_call.1} parent=1 // pred_check_branch
      %32 = sbr.rel (0) target = $region13
    $region12: #{tpu_custom_call.1} parent=1 // pred_region
      %s34 = ssub.s32 256, 256
      %35 = vsyncadd [#allocation4], %s34
      %s37 = sshll.u32 [#allocation5], 4
      %s38 = int_to_ptr.vmem [resolvable:$true] %s37
      %40 = dma.vmem_to_hbm [thread:$0]  %s38, 256, %s1, [#allocation4]
    $region13: #{tpu_custom_call.1} parent=1 // pred_fallthru
      _
    // Predicated region
    $region14: #{tpu_custom_call.1} parent=1 // pred_check
      _
    $region15: #{tpu_custom_call.1} parent=1 // pred_check_branch
      %42 = sbr.rel (0) target = $region17
    $region16: #{tpu_custom_call.1} parent=1 // pred_region
      %43 = dma.done [#allocation4], 256
    $region17: #{tpu_custom_call.1} parent=1 // pred_fallthru
      _
    %44 = vsyncpa [#allocation3], 1
    %45 = vsyncpa [#allocation4], 1

</llo_original>
